<compile_context>
chip_gen: v7x
topology: tpu7x:2x2x1
jax: 0.10.0
libtpu: 0.0.40
codegen_flags: <defaults>
</compile_context>

<pallas_src>
import jax
import jax.numpy as jnp
from jax.experimental import pallas as pl
from jax.experimental.pallas import tpu as pltpu


def _round_up(a, m):
    return ((a + m - 1) // m) * m


def _round_down(a, m):
    return (a // m) * m


# ----------------------------------------------------------------------------
# Pallas kernel: elementwise cost function (VPU + EUP hot path)
# ----------------------------------------------------------------------------
def _cost_kernel(xy_ref, z_ref):
    # xy_ref: (2, TH, TW) float32 tile (plane 0 = x, plane 1 = y).
    # z_ref : (TH, TW) float32 tile.
    x = xy_ref[0]
    y = xy_ref[1]
    t = x * y          # hoisted shared subexpressions, squared once
    s = x + y
    z_ref[...] = (-jnp.sin(x * x) * jnp.cos(3.0 * y * y) * jnp.exp(-(t * t))
                  - jnp.exp(-(s * s)))


_SMALL_BYTES = 2 << 20  # below ~2 MiB total traffic -> single ungridded block


def _vmem_capacity_bytes():
    """Physical per-core VMEM; conservative (v7x-sized) fallback."""
    try:
        info = pltpu.get_tpu_info()
        cap = getattr(info, "vmem_capacity_bytes", None)
        if cap:
            return int(cap)
    except Exception:
        pass
    return 64 << 20


def _choose_tiles(H, W, max_tile_elems):
    """Pick (th, tw). Prefer full-width tiles (contiguous per-plane DMAs)."""
    Hp = _round_up(H, 8)
    if 8 * W <= max_tile_elems:
        tw = W                                   # full width: one contiguous DMA
        th = min(_round_down(max_tile_elems // W, 8), Hp)
    else:
        # Very wide input: split W too (lane-aligned), modest row count.
        th = min(Hp, 256)
        tw = min(max(_round_down(max_tile_elems // th, 128), 128),
                 _round_up(W, 128))
    return max(th, 8), tw


def cost_func_pallas(xy):
    """xy: [2, H, W] float32 -> z: [H, W] float32."""
    _, H, W = xy.shape
    out_shape = jax.ShapeDtypeStruct((H, W), jnp.float32)
    cost = pl.CostEstimate(flops=14 * H * W,
                           transcendentals=4 * H * W,
                           bytes_accessed=12 * H * W)

    # ---- small inputs: one fused block, no grid, no pipeline overhead -------
    if 3 * H * W * 4 <= _SMALL_BYTES:
        return pl.pallas_call(
            _cost_kernel,
            out_shape=out_shape,
            cost_estimate=cost,
        )(xy)

    # ---- large inputs: tiled streaming path ----------------------------------
    vmem_cap = _vmem_capacity_bytes()
    # Resident VMEM per tile set: (2 input planes + 1 output) * 4 B, double
    # buffered -> 24 B per tile element. Budget at most ~half the physical VMEM.
    max_tile_elems = max((vmem_cap // 2) // 24, 8 * 128)
    th, tw = _choose_tiles(H, W, max_tile_elems)

    # Rebalance H blocks to equal sizes; force >= 2 blocks on the parallel H
    # axis so v7x's two TensorCores both get work (no-op cost on v5e/v6e).
    Hp = _round_up(H, 8)
    nbh = pl.cdiv(Hp, th)
    if nbh == 1 and Hp >= 16:
        nbh = 2
    if nbh > 1:
        th = max(_round_up(pl.cdiv(Hp, nbh), 8), 8)

    grid = (pl.cdiv(H, th), pl.cdiv(W, tw))

    resident = 2 * 3 * th * tw * 4              # double-buffered fused in + out
    vmem_limit = min(max(resident + (8 << 20), 32 << 20), vmem_cap)

    return pl.pallas_call(
        _cost_kernel,
        out_shape=out_shape,
        grid=grid,
        # Single fused BlockSpec: both planes arrive in one (2, th, tw) DMA.
        in_specs=[pl.BlockSpec((2, th, tw), lambda i, j: (0, i, j))],
        out_specs=pl.BlockSpec((th, tw), lambda i, j: (i, j)),
        compiler_params=pltpu.CompilerParams(
            dimension_semantics=("parallel", "parallel"),
            vmem_limit_bytes=vmem_limit),
        cost_estimate=cost,
    )(xy)


# ----------------------------------------------------------------------------
# SimpleGALModel in JAX: forward(x) = cost_func(x)[2]
# ----------------------------------------------------------------------------
class SimpleGALModelPallas:
    def __init__(self, x0, y0, gal_ratio=0.0, gal_arch=None, gal_scale=1,
                 key=None):
        if key is None:
            key = jax.random.PRNGKey(0)
        gal_arch = gal_arch or []
        self.xy = jnp.array([x0, y0], dtype=jnp.float32)
        self.gal_scale = gal_scale
        self.gal_ratio = gal_ratio
        # Deterministic RNet params (Linear layers 2 -> gal_arch... -> 2),
        # Xavier-uniform weights, zero bias. Unused by forward(), kept for
        # parity with the PyTorch module's parameter set.
        dims = [2] + list(gal_arch) + [2]
        self.rnet_params = []
        for i in range(len(dims) - 1):
            key, wk = jax.random.split(key)
            fan_in, fan_out = dims[i], dims[i + 1]
            limit = (6.0 / (fan_in + fan_out)) ** 0.5
            w = jax.random.uniform(wk, (fan_out, fan_in), jnp.float32,
                                   -limit, limit)
            b = jnp.zeros((fan_out,), jnp.float32)
            self.rnet_params.append((w, b))
        n_params = sum(w.size + b.size for w, b in self.rnet_params)
        print('# of parameters of GradPredictor: {}'.format(n_params))

    def forward(self, x):
        # x: [2, H, W] -> z: [H, W]
        return cost_func_pallas(x)

    # TODO(synk): .process() (optimizer step + RNet grad adjustment) is
    # training-loop logic with autograd/optimizer state, not a forward-pass
    # kernel; only forward() is implemented in Pallas.


# Pure-JAX reference for correctness checking.
def cost_func_ref(xy):
    x, y = xy[0], xy[1]
    return (-jnp.sin(x * x) * jnp.cos(3.0 * y * y) * jnp.exp(-(x * y) * (x * y))
            - jnp.exp(-(x + y) * (x + y)))


if __name__ == "__main__":
    key = jax.random.PRNGKey(0)
    k_in, k_big, k_model = jax.random.split(key, 3)

    # Small demo input consistent with the module: [2, H, W] coordinate planes.
    H, W = 16, 128
    xy_in = jax.random.uniform(k_in, (2, H, W), jnp.float32, -2.0, 2.0)

    model = SimpleGALModelPallas(
        x0=1.0, y0=-1.0, gal_ratio=0.5, gal_arch=[32, 32], gal_scale=1,
        key=k_model)

    z = jax.block_until_ready(model.forward(xy_in))
    z_ref = cost_func_ref(xy_in)
    assert z.shape == (H, W)
    assert jnp.allclose(z, z_ref, atol=1e-5, rtol=1e-5), "mismatch (small path)"

    # Exercise the large tiled path: non-divisible H -> padded edge handling,
    # full-width tiles, >= 2 balanced H blocks for megacore.
    Hb, Wb = 1040, 1536
    xy_big = jax.random.uniform(k_big, (2, Hb, Wb), jnp.float32, -2.0, 2.0)
    z_big = jax.block_until_ready(cost_func_pallas(xy_big))
    assert z_big.shape == (Hb, Wb)
    assert jnp.allclose(z_big, cost_func_ref(xy_big), atol=1e-5, rtol=1e-5), \
        "mismatch (tiled path)"

    print("KERNEL_OK")
</pallas_src>

<mosaic_0001>
module attributes {stable_mosaic.version = 11 : i64} {
  func.func @_cost_kernel(%arg0: memref<2x16x128xf32, #tpu.memory_space<vmem>>, %arg1: memref<16x128xf32, #tpu.memory_space<vmem>>) attributes {dimension_semantics = [], scalar_prefetch = 0 : i64, scratch_operands = 0 : i64, tpu.core_type = #tpu.core_type<tc>} {
    %c0 = arith.constant 0 : index
    %c0_0 = arith.constant 0 : index
    %c0_1 = arith.constant 0 : index
    %0 = vector.load %arg0[%c0, %c0_0, %c0_1] : memref<2x16x128xf32, #tpu.memory_space<vmem>>, vector<1x16x128xf32>
    %1 = vector.shape_cast %0 : vector<1x16x128xf32> to vector<16x128xf32>
    %c1 = arith.constant 1 : index
    %c0_2 = arith.constant 0 : index
    %c0_3 = arith.constant 0 : index
    %2 = vector.load %arg0[%c1, %c0_2, %c0_3] : memref<2x16x128xf32, #tpu.memory_space<vmem>>, vector<1x16x128xf32>
    %3 = vector.shape_cast %2 : vector<1x16x128xf32> to vector<16x128xf32>
    %4 = arith.mulf %1, %3 : vector<16x128xf32>
    %5 = arith.addf %1, %3 : vector<16x128xf32>
    %6 = arith.mulf %1, %1 : vector<16x128xf32>
    %7 = math.sin %6 : vector<16x128xf32>
    %cst = arith.constant 0.000000e+00 : f32
    %8 = vector.broadcast %cst : f32 to vector<16x128xf32>
    %9 = arith.subf %8, %7 : vector<16x128xf32>
    %cst_4 = arith.constant 3.000000e+00 : f32
    %10 = vector.broadcast %cst_4 : f32 to vector<16x128xf32>
    %11 = arith.mulf %10, %3 : vector<16x128xf32>
    %12 = arith.mulf %11, %3 : vector<16x128xf32>
    %13 = math.cos %12 : vector<16x128xf32>
    %14 = arith.mulf %9, %13 : vector<16x128xf32>
    %15 = arith.mulf %4, %4 : vector<16x128xf32>
    %cst_5 = arith.constant 0.000000e+00 : f32
    %16 = vector.broadcast %cst_5 : f32 to vector<16x128xf32>
    %17 = arith.subf %16, %15 : vector<16x128xf32>
    %18 = math.exp %17 : vector<16x128xf32>
    %19 = arith.mulf %14, %18 : vector<16x128xf32>
    %20 = arith.mulf %5, %5 : vector<16x128xf32>
    %cst_6 = arith.constant 0.000000e+00 : f32
    %21 = vector.broadcast %cst_6 : f32 to vector<16x128xf32>
    %22 = arith.subf %21, %20 : vector<16x128xf32>
    %23 = math.exp %22 : vector<16x128xf32>
    %24 = arith.subf %19, %23 : vector<16x128xf32>
    %c0_7 = arith.constant 0 : index
    %c0_8 = arith.constant 0 : index
    %25 = vector.load %arg1[%c0_7, %c0_8] : memref<16x128xf32, #tpu.memory_space<vmem>>, vector<16x128xf32>
    tpu.vector_store %arg1[%c0_7, %c0_8], %24 {strides = array<i32>} : memref<16x128xf32, #tpu.memory_space<vmem>>, vector<16x128xf32>,
    return
  }
}

</mosaic_0001>

<llo_original>
// kernel: tpu_custom_call.1
$region0: #{tpu_custom_call.1}
  #allocation0 [shape = 'u32[]', space=smem, size = 0x4, offset = 0x4, fixed_abs, tag = 'smem constant byte address 0x4 - core index']
  #allocation1 [shape = 'u32[144,128]{1,0:T(1,128)}', space=vmem, size = 0x12000, scoped, tag = 'internal scratch']
  %s0 = inlined_call_operand.hbm [shape: f32[2,16,128], index: 0, kind: input, shape index: {}]
  %s1 = inlined_call_operand.hbm [shape: f32[16,128], index: 1, kind: output, shape index: {}]
  %s2 = sld [smem:[#allocation0]]
  $region18: #{tpu_custom_call.1} parent=0
    _
  %s4 = ssub.s32 1, %s2
  %s5 = scalar_select 0, %s4, %s2
  $region1: #{tpu_custom_call.1} parent=0
    #allocation2 [shape = 'u8[16384]{0}', space=vmem, size = 0x4000, scoped, tag = 'input window, operand 0, single buffered']
    #allocation3 [shape = 's32[1]{0}', space=sflag, size = 0x4, scoped, tag = 'scoped memory for tpu_custom_call.1']
    #allocation4 [shape = 's32[1]{0}', space=sflag, size = 0x4, scoped, tag = 'scoped memory for tpu_custom_call.1']
    #allocation5 [shape = 'u8[8192]{0}', space=vmem, size = 0x2000, scoped, tag = 'output window, operand 0, single buffered']
    %6 = vsyncpa [#allocation3], 0
    %7 = vsyncpa [#allocation4], 0
    // Predicated region
    $region2: #{tpu_custom_call.1} parent=1 // pred_check
      _
    $region3: #{tpu_custom_call.1} parent=1 // pred_check_branch
      %9 = sbr.rel (0) target = $region5
    $region4: #{tpu_custom_call.1} parent=1 // pred_region
      %s11 = ssub.s32 512, 512
      %12 = vsyncadd [#allocation3], %s11
      %s13 = sshll.u32 [#allocation2], 4
      %s14 = int_to_ptr.vmem [resolvable:$true] %s13
      %19 = dma.hbm_to_vmem [thread:$0]  %s0, 512, %s14, [#allocation3], 128, 128, 8
    $region5: #{tpu_custom_call.1} parent=1 // pred_fallthru
      _
    // Predicated region
    $region6: #{tpu_custom_call.1} parent=1 // pred_check
      _
    $region7: #{tpu_custom_call.1} parent=1 // pred_check_branch
      %21 = sbr.rel (0) target = $region9
    $region8: #{tpu_custom_call.1} parent=1 // pred_region
      %22 = dma.done [#allocation3], 512
    $region9: #{tpu_custom_call.1} parent=1 // pred_fallthru
      _
    %v23 = vld [vmem:[#allocation2] sm:$0xff]
    %v24 = vld [vmem:[#allocation2 + $0x8] sm:$0xff]
    %s25 = scalar_lea.vmem [#allocation2], 16
    %v26 = vld [vmem:[%s25] sm:$0xff]
    %v27 = vld [vmem:[%s25 + $0x8] sm:$0xff]
    %v28 = vmul.f32 %v23, %v26
    %v29 = vmul.f32 %v24, %v27
    %v30 = vadd.f32 %v23, %v26
    %v31 = vadd.f32 %v24, %v27
    %v32 = vmul.f32 %v23, %v23
    %v33 = vmul.f32 %v24, %v24
    %v34 = vand.u32 2147483647, %v32
    %vm35 = vcmp.le.f32.partialorder %v34, 0.7853982
    %vm36 = vcmp.lt.s32.totalorder %v32, 0
    %v37 = vand.u32 %v32, 2139095040
    %v38 = vshrl.u32 %v37, 23
    %v39 = vsub.s32 %v38, 127
    %v40 = vand.u32 2147483647, %v32
    %v41 = vand.u32 %v40, 8388607
    %v42 = vor.u32 %v41, 8388608
    %v43 = vsub.s32 0, %v42
    %v44 = vadd.s32 %v39, 1
    %vm45 = vcmp.gt.s32.totalorder %v44, 0
    %v46 = vsel %vm45, %v44, 0
    %v47 = vshrl.u32 %v46, 5
    %v48 = vand.u32 %v46, 31
    %v49 = vsub.s32 32, %v48
    %v50 = vshrl.u32 683565275, %v49
    %v51 = vshll.u32 683565275, %v48
    %v52 = vshrl.u32 2475754826, %v49
    %v53 = vor.u32 %v51, %v52
    %v54 = vshll.u32 2475754826, %v48
    %v55 = vshrl.u32 2131351028, %v49
    %v56 = vor.u32 %v54, %v55
    %v57 = vshll.u32 2131351028, %v48
    %v58 = vshrl.u32 2102212464, %v49
    %v59 = vor.u32 %v57, %v58
    %v60 = vshll.u32 2102212464, %v48
    %v61 = vshrl.u32 920167782, %v49
    %v62 = vor.u32 %v60, %v61
    %v63 = vshll.u32 920167782, %v48
    %v64 = vshrl.u32 1326507024, %v49
    %v65 = vor.u32 %v63, %v64
    %vm66 = vcmp.lt.s32.totalorder %v47, 1
    %vm67 = vcmp.lt.s32.totalorder %v47, 2
    %vm68 = vcmp.lt.s32.totalorder %v47, 3
    %vm69 = vcmp.lt.s32.totalorder %v47, 4
    %v70 = vsel %vm66, %v50, %v53
    %v71 = vsel %vm69, %v59, 2102212464
    %v72 = vsel %vm68, %v56, %v71
    %v73 = vsel %vm67, %v70, %v72
    %v74 = vsel %vm66, %v53, %v56
    %v75 = vsel %vm69, %v62, 920167782
    %v76 = vsel %vm68, %v59, %v75
    %v77 = vsel %vm67, %v74, %v76
    %v78 = vsel %vm66, %v56, %v59
    %v79 = vsel %vm69, %v65, 1326507024
    %v80 = vsel %vm68, %v62, %v79
    %v81 = vsel %vm67, %v78, %v80
    %v82 = vshll.u32 %v42, 8
    %v83 = vmul.u32.u64.compose %v82, %v81
    %v84 = vextract.low.u32 %v83
    %v85 = vextract.high.u32 %v83
    %v86 = vmul.u32.u64.compose %v82, %v77
    %v87 = vextract.low.u32 %v86
    %v88 = vextract.high.u32 %v86
    %v89 = vmul.u32 %v82, %v73
    %v90 = vadd.s32 %v85, %v87
    %vm91 = vc.u32 %v85, %v87
    %v92 = vadd.s32 %v88, 1
    %v93 = vsel %vm91, %v92, %v88
    %v94 = vadd.s32 %v89, %v93
    %v95 = vadd.s32 %v94, 536870912
    %v96 = vshrl.u32 %v95, 30
    %v97 = vshll.u32 %v96, 30
    %v98 = vsub.s32 %v94, %v97
    %vm99 = vcmp.lt.s32.totalorder %v98, 0
    %v100 = vsub.s32 0, %v98
    %v101 = vsel %vm99, %v100, %v98
    %v102 = vclz %v101
    %v103 = vsub.s32 %v102, 2
    %vm104 = vcmp.gt.s32.totalorder 0, %v103
    %v105 = vsel %vm104, 0, %v103
    %v106 = vsub.s32 32, %v105
    %v107 = vshll.u32 %v98, %v105
    %v108 = vshrl.u32 %v90, %v106
    %v109 = vor.u32 %v107, %v108
    %v110 = vsub.s32 4294967266, %v105
    %v111 = vadd.s32 %v110, 127
    %v112 = vshll.u32 %v111, 23
    %v113 = vor.u32 4788187, %v112
    %v114 = vand.u32 2147483647, %v113
    %v116 = vcvt.s32.f32 %v109
    %v117 = vmul.f32 %v116, %v114
    %v118 = vxor.u32 %v117, 2147483648
    %v119 = vsel %vm36, %v118, %v117
    %v120 = vsub.s32 4, %v96
    %v121 = vsel %vm36, %v120, %v96
    %v122 = vsel %vm35, %v32, %v119
    %v123 = vsel %vm35, 0, %v121
    %v124 = vcosq.f32.pop %v122
    %v125 = vsinq.f32.pop %v122
    %vm126 = vweird.f32 %v32
    %v127 = vadd.s32 %v123, 3
    %v128 = vand.u32 %v127, 3
    %vm129 = vcmp.lt.s32.totalorder %v128, 2
    %vm130 = vcmp.eq.s32.totalorder %v128, 0
    %v131 = vxor.u32 %v125, 2147483648
    %v132 = vsel %vm130, %v124, %v131
    %vm133 = vcmp.eq.s32.totalorder %v128, 2
    %v134 = vxor.u32 %v124, 2147483648
    %v135 = vsel %vm133, %v134, %v125
    %v136 = vsel %vm129, %v132, %v135
    %v137 = vsel %vm126, nan, %v136
    %v138 = vand.u32 2147483647, %v33
    %vm139 = vcmp.le.f32.partialorder %v138, 0.7853982
    %vm140 = vcmp.lt.s32.totalorder %v33, 0
    %v141 = vand.u32 %v33, 2139095040
    %v142 = vshrl.u32 %v141, 23
    %v143 = vsub.s32 %v142, 127
    %v144 = vand.u32 2147483647, %v33
    %v145 = vand.u32 %v144, 8388607
    %v146 = vor.u32 %v145, 8388608
    %v147 = vsub.s32 0, %v146
    %v148 = vadd.s32 %v143, 1
    %vm149 = vcmp.gt.s32.totalorder %v148, 0
    %v150 = vsel %vm149, %v148, 0
    %v151 = vshrl.u32 %v150, 5
    %v152 = vand.u32 %v150, 31
    %v153 = vsub.s32 32, %v152
    %v154 = vshrl.u32 683565275, %v153
    %v155 = vshll.u32 683565275, %v152
    %v156 = vshrl.u32 2475754826, %v153
    %v157 = vor.u32 %v155, %v156
    %v158 = vshll.u32 2475754826, %v152
    %v159 = vshrl.u32 2131351028, %v153
    %v160 = vor.u32 %v158, %v159
    %v161 = vshll.u32 2131351028, %v152
    %v162 = vshrl.u32 2102212464, %v153
    %v163 = vor.u32 %v161, %v162
    %v164 = vshll.u32 2102212464, %v152
    %v165 = vshrl.u32 920167782, %v153
    %v166 = vor.u32 %v164, %v165
    %v167 = vshll.u32 920167782, %v152
    %v168 = vshrl.u32 1326507024, %v153
    %v169 = vor.u32 %v167, %v168
    %vm170 = vcmp.lt.s32.totalorder %v151, 1
    %vm171 = vcmp.lt.s32.totalorder %v151, 2
    %vm172 = vcmp.lt.s32.totalorder %v151, 3
    %vm173 = vcmp.lt.s32.totalorder %v151, 4
    %v174 = vsel %vm170, %v154, %v157
    %v175 = vsel %vm173, %v163, 2102212464
    %v176 = vsel %vm172, %v160, %v175
    %v177 = vsel %vm171, %v174, %v176
    %v178 = vsel %vm170, %v157, %v160
    %v179 = vsel %vm173, %v166, 920167782
    %v180 = vsel %vm172, %v163, %v179
    %v181 = vsel %vm171, %v178, %v180
    %v182 = vsel %vm170, %v160, %v163
    %v183 = vsel %vm173, %v169, 1326507024
    %v184 = vsel %vm172, %v166, %v183
    %v185 = vsel %vm171, %v182, %v184
    %v186 = vshll.u32 %v146, 8
    %v187 = vmul.u32.u64.compose %v186, %v185
    %v188 = vextract.low.u32 %v187
    %v189 = vextract.high.u32 %v187
    %v190 = vmul.u32.u64.compose %v186, %v181
    %v191 = vextract.low.u32 %v190
    %v192 = vextract.high.u32 %v190
    %v193 = vmul.u32 %v186, %v177
    %v194 = vadd.s32 %v189, %v191
    %vm195 = vc.u32 %v189, %v191
    %v196 = vadd.s32 %v192, 1
    %v197 = vsel %vm195, %v196, %v192
    %v198 = vadd.s32 %v193, %v197
    %v199 = vadd.s32 %v198, 536870912
    %v200 = vshrl.u32 %v199, 30
    %v201 = vshll.u32 %v200, 30
    %v202 = vsub.s32 %v198, %v201
    %vm203 = vcmp.lt.s32.totalorder %v202, 0
    %v204 = vsub.s32 0, %v202
    %v205 = vsel %vm203, %v204, %v202
    %v206 = vclz %v205
    %v207 = vsub.s32 %v206, 2
    %vm208 = vcmp.gt.s32.totalorder 0, %v207
    %v209 = vsel %vm208, 0, %v207
    %v210 = vsub.s32 32, %v209
    %v211 = vshll.u32 %v202, %v209
    %v212 = vshrl.u32 %v194, %v210
    %v213 = vor.u32 %v211, %v212
    %v214 = vsub.s32 4294967266, %v209
    %v215 = vadd.s32 %v214, 127
    %v216 = vshll.u32 %v215, 23
    %v217 = vor.u32 4788187, %v216
    %v218 = vand.u32 2147483647, %v217
    %v220 = vcvt.s32.f32 %v213
    %v221 = vmul.f32 %v220, %v218
    %v222 = vxor.u32 %v221, 2147483648
    %v223 = vsel %vm140, %v222, %v221
    %v224 = vsub.s32 4, %v200
    %v225 = vsel %vm140, %v224, %v200
    %v226 = vsel %vm139, %v33, %v223
    %v227 = vsel %vm139, 0, %v225
    %v228 = vcosq.f32.pop %v226
    %v229 = vsinq.f32.pop %v226
    %vm230 = vweird.f32 %v33
    %v231 = vadd.s32 %v227, 3
    %v232 = vand.u32 %v231, 3
    %vm233 = vcmp.lt.s32.totalorder %v232, 2
    %vm234 = vcmp.eq.s32.totalorder %v232, 0
    %v235 = vxor.u32 %v229, 2147483648
    %v236 = vsel %vm234, %v228, %v235
    %vm237 = vcmp.eq.s32.totalorder %v232, 2
    %v238 = vxor.u32 %v228, 2147483648
    %v239 = vsel %vm237, %v238, %v229
    %v240 = vsel %vm233, %v236, %v239
    %v241 = vsel %vm230, nan, %v240
    %v242 = vsub.f32 0.0, %v137
    %v243 = vsub.f32 0.0, %v241
    %v244 = vmul.f32 %v26, 3.0
    %v245 = vmul.f32 %v27, 3.0
    %v246 = vmul.f32 %v244, %v26
    %v247 = vmul.f32 %v245, %v27
    %v248 = vand.u32 2147483647, %v246
    %vm249 = vcmp.le.f32.partialorder %v248, 0.7853982
    %vm250 = vcmp.lt.s32.totalorder %v246, 0
    %v251 = vand.u32 %v246, 2139095040
    %v252 = vshrl.u32 %v251, 23
    %v253 = vsub.s32 %v252, 127
    %v254 = vand.u32 2147483647, %v246
    %v255 = vand.u32 %v254, 8388607
    %v256 = vor.u32 %v255, 8388608
    %v257 = vsub.s32 0, %v256
    %v258 = vadd.s32 %v253, 1
    %vm259 = vcmp.gt.s32.totalorder %v258, 0
    %v260 = vsel %vm259, %v258, 0
    %v261 = vshrl.u32 %v260, 5
    %v262 = vand.u32 %v260, 31
    %v263 = vsub.s32 32, %v262
    %v264 = vshrl.u32 683565275, %v263
    %v265 = vshll.u32 683565275, %v262
    %v266 = vshrl.u32 2475754826, %v263
    %v267 = vor.u32 %v265, %v266
    %v268 = vshll.u32 2475754826, %v262
    %v269 = vshrl.u32 2131351028, %v263
    %v270 = vor.u32 %v268, %v269
    %v271 = vshll.u32 2131351028, %v262
    %v272 = vshrl.u32 2102212464, %v263
    %v273 = vor.u32 %v271, %v272
    %v274 = vshll.u32 2102212464, %v262
    %v275 = vshrl.u32 920167782, %v263
    %v276 = vor.u32 %v274, %v275
    %v277 = vshll.u32 920167782, %v262
    %v278 = vshrl.u32 1326507024, %v263
    %v279 = vor.u32 %v277, %v278
    %vm280 = vcmp.lt.s32.totalorder %v261, 1
    %vm281 = vcmp.lt.s32.totalorder %v261, 2
    %vm282 = vcmp.lt.s32.totalorder %v261, 3
    %vm283 = vcmp.lt.s32.totalorder %v261, 4
    %v284 = vsel %vm280, %v264, %v267
    %v285 = vsel %vm283, %v273, 2102212464
    %v286 = vsel %vm282, %v270, %v285
    %v287 = vsel %vm281, %v284, %v286
    %v288 = vsel %vm280, %v267, %v270
    %v289 = vsel %vm283, %v276, 920167782
    %v290 = vsel %vm282, %v273, %v289
    %v291 = vsel %vm281, %v288, %v290
    %v292 = vsel %vm280, %v270, %v273
    %v293 = vsel %vm283, %v279, 1326507024
    %v294 = vsel %vm282, %v276, %v293
    %v295 = vsel %vm281, %v292, %v294
    %v296 = vshll.u32 %v256, 8
    %v297 = vmul.u32.u64.compose %v296, %v295
    %v298 = vextract.low.u32 %v297
    %v299 = vextract.high.u32 %v297
    %v300 = vmul.u32.u64.compose %v296, %v291
    %v301 = vextract.low.u32 %v300
    %v302 = vextract.high.u32 %v300
    %v303 = vmul.u32 %v296, %v287
    %v304 = vadd.s32 %v299, %v301
    %vm305 = vc.u32 %v299, %v301
    %v306 = vadd.s32 %v302, 1
    %v307 = vsel %vm305, %v306, %v302
    %v308 = vadd.s32 %v303, %v307
    %v309 = vadd.s32 %v308, 536870912
    %v310 = vshrl.u32 %v309, 30
    %v311 = vshll.u32 %v310, 30
    %v312 = vsub.s32 %v308, %v311
    %vm313 = vcmp.lt.s32.totalorder %v312, 0
    %v314 = vsub.s32 0, %v312
    %v315 = vsel %vm313, %v314, %v312
    %v316 = vclz %v315
    %v317 = vsub.s32 %v316, 2
    %vm318 = vcmp.gt.s32.totalorder 0, %v317
    %v319 = vsel %vm318, 0, %v317
    %v320 = vsub.s32 32, %v319
    %v321 = vshll.u32 %v312, %v319
    %v322 = vshrl.u32 %v304, %v320
    %v323 = vor.u32 %v321, %v322
    %v324 = vsub.s32 4294967266, %v319
    %v325 = vadd.s32 %v324, 127
    %v326 = vshll.u32 %v325, 23
    %v327 = vor.u32 4788187, %v326
    %v328 = vand.u32 2147483647, %v327
    %v330 = vcvt.s32.f32 %v323
    %v331 = vmul.f32 %v330, %v328
    %v332 = vxor.u32 %v331, 2147483648
    %v333 = vsel %vm250, %v332, %v331
    %v334 = vsub.s32 4, %v310
    %v335 = vsel %vm250, %v334, %v310
    %v336 = vsel %vm249, %v246, %v333
    %v337 = vsel %vm249, 0, %v335
    %v338 = vcosq.f32.pop %v336
    %v339 = vsinq.f32.pop %v336
    %vm340 = vweird.f32 %v246
    %v341 = vand.u32 %v337, 3
    %vm342 = vcmp.lt.s32.totalorder %v341, 2
    %vm343 = vcmp.eq.s32.totalorder %v341, 0
    %v344 = vxor.u32 %v339, 2147483648
    %v345 = vsel %vm343, %v338, %v344
    %vm346 = vcmp.eq.s32.totalorder %v341, 2
    %v347 = vxor.u32 %v338, 2147483648
    %v348 = vsel %vm346, %v347, %v339
    %v349 = vsel %vm342, %v345, %v348
    %v350 = vsel %vm340, nan, %v349
    %v351 = vand.u32 2147483647, %v247
    %vm352 = vcmp.le.f32.partialorder %v351, 0.7853982
    %vm353 = vcmp.lt.s32.totalorder %v247, 0
    %v354 = vand.u32 %v247, 2139095040
    %v355 = vshrl.u32 %v354, 23
    %v356 = vsub.s32 %v355, 127
    %v357 = vand.u32 2147483647, %v247
    %v358 = vand.u32 %v357, 8388607
    %v359 = vor.u32 %v358, 8388608
    %v360 = vsub.s32 0, %v359
    %v361 = vadd.s32 %v356, 1
    %vm362 = vcmp.gt.s32.totalorder %v361, 0
    %v363 = vsel %vm362, %v361, 0
    %v364 = vshrl.u32 %v363, 5
    %v365 = vand.u32 %v363, 31
    %v366 = vsub.s32 32, %v365
    %v367 = vshrl.u32 683565275, %v366
    %v368 = vshll.u32 683565275, %v365
    %v369 = vshrl.u32 2475754826, %v366
    %v370 = vor.u32 %v368, %v369
    %v371 = vshll.u32 2475754826, %v365
    %v372 = vshrl.u32 2131351028, %v366
    %v373 = vor.u32 %v371, %v372
    %v374 = vshll.u32 2131351028, %v365
    %v375 = vshrl.u32 2102212464, %v366
    %v376 = vor.u32 %v374, %v375
    %v377 = vshll.u32 2102212464, %v365
    %v378 = vshrl.u32 920167782, %v366
    %v379 = vor.u32 %v377, %v378
    %v380 = vshll.u32 920167782, %v365
    %v381 = vshrl.u32 1326507024, %v366
    %v382 = vor.u32 %v380, %v381
    %vm383 = vcmp.lt.s32.totalorder %v364, 1
    %vm384 = vcmp.lt.s32.totalorder %v364, 2
    %vm385 = vcmp.lt.s32.totalorder %v364, 3
    %vm386 = vcmp.lt.s32.totalorder %v364, 4
    %v387 = vsel %vm383, %v367, %v370
    %v388 = vsel %vm386, %v376, 2102212464
    %v389 = vsel %vm385, %v373, %v388
    %v390 = vsel %vm384, %v387, %v389
    %v391 = vsel %vm383, %v370, %v373
    %v392 = vsel %vm386, %v379, 920167782
    %v393 = vsel %vm385, %v376, %v392
    %v394 = vsel %vm384, %v391, %v393
    %v395 = vsel %vm383, %v373, %v376
    %v396 = vsel %vm386, %v382, 1326507024
    %v397 = vsel %vm385, %v379, %v396
    %v398 = vsel %vm384, %v395, %v397
    %v399 = vshll.u32 %v359, 8
    %v400 = vmul.u32.u64.compose %v399, %v398
    %v401 = vextract.low.u32 %v400
    %v402 = vextract.high.u32 %v400
    %v403 = vmul.u32.u64.compose %v399, %v394
    %v404 = vextract.low.u32 %v403
    %v405 = vextract.high.u32 %v403
    %v406 = vmul.u32 %v399, %v390
    %v407 = vadd.s32 %v402, %v404
    %vm408 = vc.u32 %v402, %v404
    %v409 = vadd.s32 %v405, 1
    %v410 = vsel %vm408, %v409, %v405
    %v411 = vadd.s32 %v406, %v410
    %v412 = vadd.s32 %v411, 536870912
    %v413 = vshrl.u32 %v412, 30
    %v414 = vshll.u32 %v413, 30
    %v415 = vsub.s32 %v411, %v414
    %vm416 = vcmp.lt.s32.totalorder %v415, 0
    %v417 = vsub.s32 0, %v415
    %v418 = vsel %vm416, %v417, %v415
    %v419 = vclz %v418
    %v420 = vsub.s32 %v419, 2
    %vm421 = vcmp.gt.s32.totalorder 0, %v420
    %v422 = vsel %vm421, 0, %v420
    %v423 = vsub.s32 32, %v422
    %v424 = vshll.u32 %v415, %v422
    %v425 = vshrl.u32 %v407, %v423
    %v426 = vor.u32 %v424, %v425
    %v427 = vsub.s32 4294967266, %v422
    %v428 = vadd.s32 %v427, 127
    %v429 = vshll.u32 %v428, 23
    %v430 = vor.u32 4788187, %v429
    %v431 = vand.u32 2147483647, %v430
    %v433 = vcvt.s32.f32 %v426
    %v434 = vmul.f32 %v433, %v431
    %v435 = vxor.u32 %v434, 2147483648
    %v436 = vsel %vm353, %v435, %v434
    %v437 = vsub.s32 4, %v413
    %v438 = vsel %vm353, %v437, %v413
    %v439 = vsel %vm352, %v247, %v436
    %v440 = vsel %vm352, 0, %v438
    %v441 = vcosq.f32.pop %v439
    %v442 = vsinq.f32.pop %v439
    %vm443 = vweird.f32 %v247
    %v444 = vand.u32 %v440, 3
    %vm445 = vcmp.lt.s32.totalorder %v444, 2
    %vm446 = vcmp.eq.s32.totalorder %v444, 0
    %v447 = vxor.u32 %v442, 2147483648
    %v448 = vsel %vm446, %v441, %v447
    %vm449 = vcmp.eq.s32.totalorder %v444, 2
    %v450 = vxor.u32 %v441, 2147483648
    %v451 = vsel %vm449, %v450, %v442
    %v452 = vsel %vm445, %v448, %v451
    %v453 = vsel %vm443, nan, %v452
    %v454 = vmul.f32 %v242, %v350
    %v455 = vmul.f32 %v243, %v453
    %v456 = vmul.f32 %v28, %v28
    %v457 = vmul.f32 %v29, %v29
    %v458 = vsub.f32 0.0, %v456
    %v459 = vsub.f32 0.0, %v457
    %v460 = vmul.f32 %v458, 1.442695
    %v461 = vpow.pop %v460
    %v462 = vmul.f32 %v459, 1.442695
    %v463 = vpow.pop %v462
    %v464 = vmul.f32 %v454, %v461
    %v465 = vmul.f32 %v455, %v463
    %v466 = vmul.f32 %v30, %v30
    %v467 = vmul.f32 %v31, %v31
    %v468 = vsub.f32 0.0, %v466
    %v469 = vsub.f32 0.0, %v467
    %v470 = vmul.f32 %v468, 1.442695
    %v471 = vpow.pop %v470
    %v472 = vmul.f32 %v469, 1.442695
    %v473 = vpow.pop %v472
    %v474 = vsub.f32 %v464, %v471
    %v475 = vsub.f32 %v465, %v473
    %476 = vst [vmem:[#allocation5] sm:$0xff] %v474
    %477 = vst [vmem:[#allocation5 + $0x8] sm:$0xff] %v475
    // Predicated region
    $region10: #{tpu_custom_call.1} parent=1 // pred_check
      _
    $region11: #{tpu_custom_call.1} parent=1 // pred_check_branch
      %479 = sbr.rel (0) target = $region13
    $region12: #{tpu_custom_call.1} parent=1 // pred_region
      %s481 = ssub.s32 256, 256
      %482 = vsyncadd [#allocation4], %s481
      %s483 = sshll.u32 [#allocation5], 4
      %s484 = int_to_ptr.vmem [resolvable:$true] %s483
      %489 = dma.vmem_to_hbm [thread:$0]  %s484, 256, %s1, [#allocation4], 128, 128, 8
    $region13: #{tpu_custom_call.1} parent=1 // pred_fallthru
      _
    // Predicated region
    $region14: #{tpu_custom_call.1} parent=1 // pred_check
      _
    $region15: #{tpu_custom_call.1} parent=1 // pred_check_branch
      %491 = sbr.rel (0) target = $region17
    $region16: #{tpu_custom_call.1} parent=1 // pred_region
      %492 = dma.done [#allocation4], 256
    $region17: #{tpu_custom_call.1} parent=1 // pred_fallthru
      _
    %493 = vsyncpa [#allocation3], 1
    %494 = vsyncpa [#allocation4], 1

</llo_original>
